<compile_context>
chip_gen: v5e
topology: v5e:2x2
jax: 0.10.0
libtpu: 0.0.40
codegen_flags: <defaults>
</compile_context>

<pallas_src>
import jax
import jax.numpy as jnp
from jax.experimental import pallas as pl
from jax.experimental.pallas import tpu as pltpu

_SUBLANE = 8
_PALLAS_MIN_BATCH = 256  # below this, pallas_call fixed overhead > math


def _round_up(x, m):
    return ((x + m - 1) // m) * m


# ----------------------------------------------------------------------------
# Kernel: one batch tile -> logits tile.  Weights/biases are VMEM-resident
# (constant index_maps); only x / out stream with the grid.
# ----------------------------------------------------------------------------
def _mlp_kernel(x_ref, w1_ref, b1_ref, w2_ref, b2_ref, o_ref):
    # hidden = tanh(x @ W1 + b1)      (f32 in, f32 MXU accumulation, f32 tanh)
    h = jnp.dot(x_ref[...], w1_ref[...], preferred_element_type=jnp.float32)
    h = jnp.tanh(h + b1_ref[...])
    # logits = h @ W2 + b2            (unpadded n_actions columns)
    out = jnp.dot(h, w2_ref[...], preferred_element_type=jnp.float32)
    o_ref[...] = (out + b2_ref[...]).astype(o_ref.dtype)


# ----------------------------------------------------------------------------
# Parameter preparation (run ONCE per parameter update, not per forward)
# ----------------------------------------------------------------------------
def prepare_params(w1, b1, w2, b2):
    """Transpose PyTorch-layout weights to (in, out); reshape biases to 2-D.

    Args (PyTorch nn.Linear convention):
      w1: (32, n_features), b1: (32,), w2: (n_actions, 32), b2: (n_actions,)
    Returns:
      (w1t, b1r, w2t, b2r), n_actions   -- all float32, no padding.
    """
    hidden = w1.shape[0]
    n_actions = w2.shape[0]
    w1t = w1.T.astype(jnp.float32)                    # (F, 32)
    b1r = b1.reshape(1, hidden).astype(jnp.float32)   # (1, 32)
    w2t = w2.T.astype(jnp.float32)                    # (32, A)
    b2r = b2.reshape(1, n_actions).astype(jnp.float32)  # (1, A)
    return (w1t, b1r, w2t, b2r), n_actions


# ----------------------------------------------------------------------------
# Forward passes
# ----------------------------------------------------------------------------
def net_forward_pallas(x, w1t, b1, w2t, b2, *, block_batch=4096):
    """Pallas forward for batched rollouts.  x: (B, n_features) f32."""
    B, n_features = x.shape
    hidden = w1t.shape[1]
    n_actions = w2t.shape[1]

    # --- batch tiling ---------------------------------------------------
    # Aim for tiles of up to `block_batch` rows, but always >= 2 grid steps
    # when the batch allows it (dual-TC sharding on v7x; harmless elsewhere).
    b8 = _round_up(B, _SUBLANE)
    n_tiles = pl.cdiv(b8, block_batch)
    if b8 >= 2 * _SUBLANE:
        n_tiles = max(n_tiles, 2)
    tb = _round_up(pl.cdiv(b8, n_tiles), _SUBLANE)
    b_pad = _round_up(B, tb)

    xin = x.astype(jnp.float32)
    if b_pad != B:
        xin = jnp.pad(xin, ((0, b_pad - B), (0, 0)))

    # --- VMEM budget (v5e scoped default 16 MiB; v7x physical 64 MiB) ----
    weight_bytes = 4 * (n_features * hidden + hidden + hidden * n_actions + n_actions)
    stream_bytes = 2 * tb * (n_features + n_actions) * 4   # double-buffered tiles
    est_vmem = 2 * weight_bytes + stream_bytes
    compiler_kwargs = dict(dimension_semantics=("parallel",))
    if est_vmem > 12 * 1024 * 1024:          # leave headroom under v5e default
        compiler_kwargs["vmem_limit_bytes"] = min(2 * est_vmem, 48 * 1024 * 1024)

    out = pl.pallas_call(
        _mlp_kernel,
        out_shape=jax.ShapeDtypeStruct((b_pad, n_actions), jnp.float32),
        grid_spec=pltpu.PrefetchScalarGridSpec(
            num_scalar_prefetch=0,
            grid=(b_pad // tb,),
            in_specs=[
                pl.BlockSpec((tb, n_features), lambda i: (i, 0)),       # streamed
                pl.BlockSpec((n_features, hidden), lambda i: (0, 0)),   # resident
                pl.BlockSpec((1, hidden), lambda i: (0, 0)),            # resident
                pl.BlockSpec((hidden, n_actions), lambda i: (0, 0)),    # resident
                pl.BlockSpec((1, n_actions), lambda i: (0, 0)),         # resident
            ],
            out_specs=pl.BlockSpec((tb, n_actions), lambda i: (i, 0)),  # unpadded
        ),
        compiler_params=pltpu.CompilerParams(**compiler_kwargs),
    )(xin, w1t, b1, w2t, b2)
    return out[:B]


def net_forward(x, w1t, b1, w2t, b2, *, block_batch=4096):
    """Dispatcher: tiny batches use fused XLA, big batches use the kernel."""
    if x.shape[0] < _PALLAS_MIN_BATCH:
        xf = x.astype(jnp.float32)
        h = jnp.tanh(jnp.dot(xf, w1t, preferred_element_type=jnp.float32) + b1)
        return jnp.dot(h, w2t, preferred_element_type=jnp.float32) + b2
    return net_forward_pallas(x, w1t, b1, w2t, b2, block_batch=block_batch)


# ----------------------------------------------------------------------------
# Init (PyTorch-style nn.Linear init: uniform +-1/sqrt(fan_in))
# ----------------------------------------------------------------------------
def init_params(key, n_features, n_actions, hidden=32):
    k1, k2, k3, k4 = jax.random.split(key, 4)
    b1_ = 1.0 / jnp.sqrt(n_features)
    b2_ = 1.0 / jnp.sqrt(hidden)
    w1 = jax.random.uniform(k1, (hidden, n_features), jnp.float32, -b1_, b1_)
    b1 = jax.random.uniform(k2, (hidden,), jnp.float32, -b1_, b1_)
    w2 = jax.random.uniform(k3, (n_actions, hidden), jnp.float32, -b2_, b2_)
    b2 = jax.random.uniform(k4, (n_actions,), jnp.float32, -b2_, b2_)
    return w1, b1, w2, b2


if __name__ == "__main__":
    batch = 200          # exercises grid=(2,) with tb=104 and batch padding
    n_features = 8
    n_actions = 4

    key = jax.random.PRNGKey(0)
    kx, kp = jax.random.split(key)
    x = jax.random.normal(kx, (batch, n_features), dtype=jnp.float32)
    w1, b1, w2, b2 = init_params(kp, n_features, n_actions)

    # One-time parameter preparation (hoisted out of the forward path).
    (w1t, b1r, w2t, b2r), n_act = prepare_params(w1, b1, w2, b2)

    # Pallas path (batched rollout case).
    logits = net_forward_pallas(x, w1t, b1r, w2t, b2r, block_batch=128)
    jax.block_until_ready(logits)
    assert logits.shape == (batch, n_actions)

    # Check against the PyTorch-equivalent f32 math.  Tolerance covers TPU
    # default matmul precision (bf16-pass MXU) on both sides.
    ref_f32 = jnp.tanh(x @ w1.T + b1) @ w2.T + b2
    assert jnp.allclose(logits, ref_f32, atol=2e-2, rtol=2e-2), (
        float(jnp.max(jnp.abs(logits - ref_f32))))

    # Tiny-batch dispatch path (single-env inference) also matches.
    small = net_forward(x[:8], w1t, b1r, w2t, b2r)
    jax.block_until_ready(small)
    assert small.shape == (8, n_actions)
    assert jnp.allclose(small, ref_f32[:8], atol=2e-2, rtol=2e-2)

    print("KERNEL_OK")
</pallas_src>

<mosaic_0001>
module attributes {stable_mosaic.version = 11 : i64} {
  func.func @_mlp_kernel(%arg0: i32, %arg1: memref<104x8xf32, #tpu.memory_space<vmem>>, %arg2: memref<8x32xf32, #tpu.memory_space<vmem>>, %arg3: memref<1x32xf32, #tpu.memory_space<vmem>>, %arg4: memref<32x4xf32, #tpu.memory_space<vmem>>, %arg5: memref<1x4xf32, #tpu.memory_space<vmem>>, %arg6: memref<104x4xf32, #tpu.memory_space<vmem>>) attributes {dimension_semantics = [#tpu.dimension_semantics<parallel>], iteration_bounds = array<i64: 2>, scalar_prefetch = 0 : i64, scratch_operands = 0 : i64, tpu.core_type = #tpu.core_type<tc>, window_params = [{transform_indices = @transform_0, window_bounds = array<i64: 104, 8>}, {pipeline_mode = #tpu.pipeline_mode<synchronous>, transform_indices = @transform_1, window_bounds = array<i64: 8, 32>}, {pipeline_mode = #tpu.pipeline_mode<synchronous>, transform_indices = @transform_2, window_bounds = array<i64: 1, 32>}, {pipeline_mode = #tpu.pipeline_mode<synchronous>, transform_indices = @transform_3, window_bounds = array<i64: 32, 4>}, {pipeline_mode = #tpu.pipeline_mode<synchronous>, transform_indices = @transform_4, window_bounds = array<i64: 1, 4>}, {transform_indices = @transform_5, window_bounds = array<i64: 104, 4>}]} {
    %c0 = arith.constant 0 : index
    %c0_0 = arith.constant 0 : index
    %0 = vector.load %arg1[%c0, %c0_0] : memref<104x8xf32, #tpu.memory_space<vmem>>, vector<104x8xf32>
    %c0_1 = arith.constant 0 : index
    %c0_2 = arith.constant 0 : index
    %1 = vector.load %arg2[%c0_1, %c0_2] : memref<8x32xf32, #tpu.memory_space<vmem>>, vector<8x32xf32>
    %cst = arith.constant dense<0.000000e+00> : vector<104x32xf32>
    %2 = tpu.matmul %0, %1, %cst {dimension_numbers = #tpu.dot_dimension_numbers<[1], [0], [0], [1], [0, 0, 1, 1], [], []>} : vector<104x8xf32>, vector<8x32xf32>, vector<104x32xf32> -> vector<104x32xf32>
    %c0_3 = arith.constant 0 : index
    %c0_4 = arith.constant 0 : index
    %3 = vector.load %arg3[%c0_3, %c0_4] : memref<1x32xf32, #tpu.memory_space<vmem>>, vector<1x32xf32>
    %4 = vector.broadcast %3 : vector<1x32xf32> to vector<104x32xf32>
    %5 = arith.addf %2, %4 : vector<104x32xf32>
    %6 = math.tanh %5 : vector<104x32xf32>
    %c0_5 = arith.constant 0 : index
    %c0_6 = arith.constant 0 : index
    %7 = vector.load %arg4[%c0_5, %c0_6] : memref<32x4xf32, #tpu.memory_space<vmem>>, vector<32x4xf32>
    %cst_7 = arith.constant dense<0.000000e+00> : vector<104x4xf32>
    %8 = tpu.matmul %6, %7, %cst_7 {dimension_numbers = #tpu.dot_dimension_numbers<[1], [0], [0], [1], [0, 0, 1, 1], [], []>} : vector<104x32xf32>, vector<32x4xf32>, vector<104x4xf32> -> vector<104x4xf32>
    %c0_8 = arith.constant 0 : index
    %c0_9 = arith.constant 0 : index
    %9 = vector.load %arg5[%c0_8, %c0_9] : memref<1x4xf32, #tpu.memory_space<vmem>>, vector<1x4xf32>
    %10 = vector.broadcast %9 : vector<1x4xf32> to vector<104x4xf32>
    %11 = arith.addf %8, %10 : vector<104x4xf32>
    %c0_10 = arith.constant 0 : index
    %c0_11 = arith.constant 0 : index
    %12 = vector.load %arg6[%c0_10, %c0_11] : memref<104x4xf32, #tpu.memory_space<vmem>>, vector<104x4xf32>
    tpu.vector_store %arg6[%c0_10, %c0_11], %11 {strides = array<i32>} : memref<104x4xf32, #tpu.memory_space<vmem>>, vector<104x4xf32>,
    return
  }
  func.func @transform_0(%arg0: i32) -> (i32, i32) {
    %c0_i32 = arith.constant 0 : i32
    %c0_i32_0 = arith.constant 0 : i32
    return %arg0, %c0_i32 : i32, i32
  }
  func.func @transform_1(%arg0: i32) -> (i32, i32) {
    %c0_i32 = arith.constant 0 : i32
    %c0_i32_0 = arith.constant 0 : i32
    %c0_i32_1 = arith.constant 0 : i32
    return %c0_i32, %c0_i32_0 : i32, i32
  }
  func.func @transform_2(%arg0: i32) -> (i32, i32) {
    %c0_i32 = arith.constant 0 : i32
    %c0_i32_0 = arith.constant 0 : i32
    %c0_i32_1 = arith.constant 0 : i32
    return %c0_i32, %c0_i32_0 : i32, i32
  }
  func.func @transform_3(%arg0: i32) -> (i32, i32) {
    %c0_i32 = arith.constant 0 : i32
    %c0_i32_0 = arith.constant 0 : i32
    %c0_i32_1 = arith.constant 0 : i32
    return %c0_i32, %c0_i32_0 : i32, i32
  }
  func.func @transform_4(%arg0: i32) -> (i32, i32) {
    %c0_i32 = arith.constant 0 : i32
    %c0_i32_0 = arith.constant 0 : i32
    %c0_i32_1 = arith.constant 0 : i32
    return %c0_i32, %c0_i32_0 : i32, i32
  }
  func.func @transform_5(%arg0: i32) -> (i32, i32) {
    %c0_i32 = arith.constant 0 : i32
    %c0_i32_0 = arith.constant 0 : i32
    return %arg0, %c0_i32 : i32, i32
  }
}

</mosaic_0001>

<llo_original>
// kernel: tpu_custom_call.1
$region0: #{tpu_custom_call.1}
  #allocation0 [shape = 'u32[]', space=smem, size = 0x4, offset = 0x4, fixed_abs, tag = 'smem constant byte address 0x4 - core index']
  #allocation1 [shape = 'u32[72,128]{1,0:T(1,128)}', space=vmem, size = 0x9000, scoped, tag = 'internal scratch']
  %s0 = inlined_call_operand.vmem [shape: f32[208,8], index: 0, kind: input, shape index: {}]
  %s1 = inlined_call_operand.vmem [shape: f32[8,32], index: 1, kind: input, shape index: {}]
  %s2 = inlined_call_operand.vmem [shape: f32[1,32], index: 2, kind: input, shape index: {}]
  %s3 = inlined_call_operand.vmem [shape: f32[32,4], index: 3, kind: input, shape index: {}]
  %s4 = inlined_call_operand.vmem [shape: f32[1,4], index: 4, kind: input, shape index: {}]
  %s5 = inlined_call_operand.vmem [shape: f32[208,4], index: 5, kind: output, shape index: {}]
  %s6 = sld [smem:[#allocation0]]
  $region53: #{tpu_custom_call.1} parent=0
    _
  %s8 = ssub.s32 1, %s6
  %s9 = scalar_select 0, %s8, %s6
  loop: start=0, step=1, limit=4
  $region2: #{tpu_custom_call.1} parent=0 // loop_pre_header
    _
  $region3: #{tpu_custom_call.1} parent=0 // loop_header
    %s11 = sphi 0, %s15
    %p12 = scmp.ge.s32.totalorder %s11, 4
    %s21 = sphi 0, %s23
    %s24 = sphi 0, %s21
    %s25 = sphi 0, %s24
    %s41 = sphi 0, %s25
    %s45 = sphi 0, %s45
    %s47 = sphi 0, %s45
    %s48 = sphi 0, %s47
    %s62 = sphi 0, %s48
    %s66 = sphi 0, %s66
    %s68 = sphi 0, %s66
    %s69 = sphi 0, %s68
    %s83 = sphi 0, %s69
    %s87 = sphi 0, %s87
    %s89 = sphi 0, %s87
    %s90 = sphi 0, %s89
    %s104 = sphi 0, %s90
    %s108 = sphi 0, %s108
    %s110 = sphi 0, %s108
    %s111 = sphi 0, %s110
    %s125 = sphi 0, %s111
    %s131 = sphi 0, %s133
    %s134 = sphi 0, %s131
    %s135 = sphi 0, %s134
    %s151 = sphi 0, %s135
  $region4: #{tpu_custom_call.1} parent=0 // loop_header_branch
    %14 = sbr.rel (%p12) target = $region8
  $region5: #{tpu_custom_call.1} parent=0 // loop_body
    %s16 = ssub.s32 %s11, 1
    %s17 = ssub.s32 %s11, 2
    %s18 = sadd.s32 %s11, 1
    %s19 = ssub.s32 %s11, %s18
    %p20 = scmp.eq.s32.totalorder %s19, 0
    %s22 = sadd.s32 %s21, 1
    %s23 = scalar_select %p20, %s21, %s22
    %p26 = pneg %p20
    %p27 = scmp.eq.s32.totalorder %s11, 1
    %p28 = por %p26, %p27
    %p29 = scmp.ne.s32.totalorder %s21, %s24
    %p30 = scmp.eq.s32.totalorder %s11, 0
    %p31 = por %p29, %p30
    %p32 = scmp.ne.s32.totalorder %s21, %s24
    %p33 = scmp.eq.s32.totalorder %s16, 1
    %p34 = por %p32, %p33
    %p35 = scmp.ne.s32.totalorder %s24, %s25
    %p36 = scmp.eq.s32.totalorder %s16, 0
    %p37 = por %p35, %p36
    %p38 = scmp.ne.s32.totalorder %s24, %s25
    %p39 = scmp.eq.s32.totalorder %s17, 1
    %p40 = por %p38, %p39
    %p42 = scmp.ne.s32.totalorder %s25, %s41
    %p43 = scmp.eq.s32.totalorder %s17, 0
    %p44 = por %p42, %p43
    %s46 = sadd.s32 %s45, 1
    %p49 = scmp.eq.s32.totalorder %s11, 1
    %p50 = scmp.ne.s32.totalorder %s45, %s47
    %p51 = scmp.eq.s32.totalorder %s11, 0
    %p52 = por %p50, %p51
    %p53 = scmp.ne.s32.totalorder %s45, %s47
    %p54 = scmp.eq.s32.totalorder %s16, 1
    %p55 = por %p53, %p54
    %p56 = scmp.ne.s32.totalorder %s47, %s48
    %p57 = scmp.eq.s32.totalorder %s16, 0
    %p58 = por %p56, %p57
    %p59 = scmp.ne.s32.totalorder %s47, %s48
    %p60 = scmp.eq.s32.totalorder %s17, 1
    %p61 = por %p59, %p60
    %p63 = scmp.ne.s32.totalorder %s48, %s62
    %p64 = scmp.eq.s32.totalorder %s17, 0
    %p65 = por %p63, %p64
    %s67 = sadd.s32 %s66, 1
    %p70 = scmp.eq.s32.totalorder %s11, 1
    %p71 = scmp.ne.s32.totalorder %s66, %s68
    %p72 = scmp.eq.s32.totalorder %s11, 0
    %p73 = por %p71, %p72
    %p74 = scmp.ne.s32.totalorder %s66, %s68
    %p75 = scmp.eq.s32.totalorder %s16, 1
    %p76 = por %p74, %p75
    %p77 = scmp.ne.s32.totalorder %s68, %s69
    %p78 = scmp.eq.s32.totalorder %s16, 0
    %p79 = por %p77, %p78
    %p80 = scmp.ne.s32.totalorder %s68, %s69
    %p81 = scmp.eq.s32.totalorder %s17, 1
    %p82 = por %p80, %p81
    %p84 = scmp.ne.s32.totalorder %s69, %s83
    %p85 = scmp.eq.s32.totalorder %s17, 0
    %p86 = por %p84, %p85
    %s88 = sadd.s32 %s87, 1
    %p91 = scmp.eq.s32.totalorder %s11, 1
    %p92 = scmp.ne.s32.totalorder %s87, %s89
    %p93 = scmp.eq.s32.totalorder %s11, 0
    %p94 = por %p92, %p93
    %p95 = scmp.ne.s32.totalorder %s87, %s89
    %p96 = scmp.eq.s32.totalorder %s16, 1
    %p97 = por %p95, %p96
    %p98 = scmp.ne.s32.totalorder %s89, %s90
    %p99 = scmp.eq.s32.totalorder %s16, 0
    %p100 = por %p98, %p99
    %p101 = scmp.ne.s32.totalorder %s89, %s90
    %p102 = scmp.eq.s32.totalorder %s17, 1
    %p103 = por %p101, %p102
    %p105 = scmp.ne.s32.totalorder %s90, %s104
    %p106 = scmp.eq.s32.totalorder %s17, 0
    %p107 = por %p105, %p106
    %s109 = sadd.s32 %s108, 1
    %p112 = scmp.eq.s32.totalorder %s11, 1
    %p113 = scmp.ne.s32.totalorder %s108, %s110
    %p114 = scmp.eq.s32.totalorder %s11, 0
    %p115 = por %p113, %p114
    %p116 = scmp.ne.s32.totalorder %s108, %s110
    %p117 = scmp.eq.s32.totalorder %s16, 1
    %p118 = por %p116, %p117
    %p119 = scmp.ne.s32.totalorder %s110, %s111
    %p120 = scmp.eq.s32.totalorder %s16, 0
    %p121 = por %p119, %p120
    %p122 = scmp.ne.s32.totalorder %s110, %s111
    %p123 = scmp.eq.s32.totalorder %s17, 1
    %p124 = por %p122, %p123
    %p126 = scmp.ne.s32.totalorder %s111, %s125
    %p127 = scmp.eq.s32.totalorder %s17, 0
    %p128 = por %p126, %p127
    %s129 = ssub.s32 %s11, %s18
    %p130 = scmp.eq.s32.totalorder %s129, 0
    %s132 = sadd.s32 %s131, 1
    %s133 = scalar_select %p130, %s131, %s132
    %p136 = pneg %p130
    %p137 = scmp.eq.s32.totalorder %s11, 1
    %p138 = por %p136, %p137
    %p139 = scmp.ne.s32.totalorder %s131, %s134
    %p140 = scmp.eq.s32.totalorder %s11, 0
    %p141 = por %p139, %p140
    %p142 = scmp.ne.s32.totalorder %s131, %s134
    %p143 = scmp.eq.s32.totalorder %s16, 1
    %p144 = por %p142, %p143
    %p145 = scmp.ne.s32.totalorder %s134, %s135
    %p146 = scmp.eq.s32.totalorder %s16, 0
    %p147 = por %p145, %p146
    %p148 = scmp.ne.s32.totalorder %s134, %s135
    %p149 = scmp.eq.s32.totalorder %s17, 1
    %p150 = por %p148, %p149
    %p152 = scmp.ne.s32.totalorder %s135, %s151
    %p153 = scmp.eq.s32.totalorder %s17, 0
    %p154 = por %p152, %p153
    %p155 = scmp.le.s32.totalorder 1, %s11
    %p156 = scmp.lt.s32.totalorder %s11, 3
    %p157 = pnand %p155, %p156
    %p158 = pneg %p157
    // Predicated region
    $region9: #{tpu_custom_call.1} parent=5 // pred_check
      _
    $region10: #{tpu_custom_call.1} parent=5 // pred_check_branch
      %160 = sbr.rel (%p157) target = $region12
    $region11: #{tpu_custom_call.1} parent=5 // pred_region
      %s161 = ssub.s32 %s11, 1
      // Predicated region
      $region13: #{tpu_custom_call.1} parent=11 // pred_check
        %p162 = pneg %p58
      $region14: #{tpu_custom_call.1} parent=11 // pred_check_branch
        %164 = sbr.rel (%p162) target = $region16
      $region15: #{tpu_custom_call.1} parent=11 // pred_region
        _
      $region16: #{tpu_custom_call.1} parent=11 // pred_fallthru
        _
      // Predicated region
      $region17: #{tpu_custom_call.1} parent=11 // pred_check
        %p165 = pneg %p79
      $region18: #{tpu_custom_call.1} parent=11 // pred_check_branch
        %167 = sbr.rel (%p165) target = $region20
      $region19: #{tpu_custom_call.1} parent=11 // pred_region
        _
      $region20: #{tpu_custom_call.1} parent=11 // pred_fallthru
        _
      // Predicated region
      $region21: #{tpu_custom_call.1} parent=11 // pred_check
        %p168 = pneg %p100
      $region22: #{tpu_custom_call.1} parent=11 // pred_check_branch
        %170 = sbr.rel (%p168) target = $region24
      $region23: #{tpu_custom_call.1} parent=11 // pred_region
        _
      $region24: #{tpu_custom_call.1} parent=11 // pred_fallthru
        _
      // Predicated region
      $region25: #{tpu_custom_call.1} parent=11 // pred_check
        %p171 = pneg %p121
      $region26: #{tpu_custom_call.1} parent=11 // pred_check_branch
        %173 = sbr.rel (%p171) target = $region28
      $region27: #{tpu_custom_call.1} parent=11 // pred_region
        _
      $region28: #{tpu_custom_call.1} parent=11 // pred_fallthru
        _
    $region12: #{tpu_custom_call.1} parent=5 // pred_fallthru
      _
    %p174 = scmp.lt.s32.totalorder %s11, 2
    // Predicated region
    $region29: #{tpu_custom_call.1} parent=5 // pred_check
      %p175 = pneg %p174
    $region30: #{tpu_custom_call.1} parent=5 // pred_check_branch
      %177 = sbr.rel (%p175) target = $region32
    $region31: #{tpu_custom_call.1} parent=5 // pred_region
      // Predicated region
      $region33: #{tpu_custom_call.1} parent=31 // pred_check
        %p178 = pneg %p31
      $region34: #{tpu_custom_call.1} parent=31 // pred_check_branch
        %180 = sbr.rel (%p178) target = $region36
      $region35: #{tpu_custom_call.1} parent=31 // pred_region
        %s181 = smul.u32 13, %s11
        %p182 = scmp.lt.s32.totalorder %s181, 25
        %s183 = scalar_select %p182, %s181, 25
        %s184 = smul.addr %s183, 8
        %s185 = scalar_lea.vmem %s0, %s184
        %s186 = smul.u32 13, %s11
      $region36: #{tpu_custom_call.1} parent=31 // pred_fallthru
        _
    $region32: #{tpu_custom_call.1} parent=5 // pred_fallthru
      _
    %p187 = scmp.le.s32.totalorder 1, %s11
    %p188 = scmp.lt.s32.totalorder %s11, 3
    %p189 = pnand %p187, %p188
    %p190 = pneg %p189
    // Predicated region
    $region37: #{tpu_custom_call.1} parent=5 // pred_check
      _
    $region38: #{tpu_custom_call.1} parent=5 // pred_check_branch
      %192 = sbr.rel (%p189) target = $region40
    $region39: #{tpu_custom_call.1} parent=5 // pred_region
      %s193 = ssub.s32 %s11, 1
      %s194 = smul.u32 13, %s16
      %p195 = scmp.lt.s32.totalorder %s194, 25
      %s196 = scalar_select %p195, %s194, 25
      %s197 = smul.addr %s196, 8
      %s198 = scalar_lea.vmem %s0, %s197
      %p199 = pneg %p37
      %p200 = pneg %p34
      %p201 = pneg %p58
      %p202 = pneg %p55
      %p203 = pneg %p79
      %p204 = pneg %p76
      %p205 = pneg %p100
      %p206 = pneg %p97
      %p207 = pneg %p121
      %p208 = pneg %p118
      %p209 = pneg %p147
      %p210 = pneg %p144
      %s211 = smul.u32 13, %s16
      %p212 = scmp.lt.s32.totalorder %s211, 25
      %s213 = scalar_select %p212, %s211, 25
      %s214 = smul.addr %s213, 8
      %s215 = scalar_lea.vmem %s5, %s214
      %s216 = smul.u32 13, %s16
      %p217 = scmp.lt.s32.totalorder %s216, 25
      %s218 = scalar_select %p217, %s216, 25
      %s219 = smul.addr %s218, 8
      %s220 = scalar_lea.vmem %s0, %s219
      %s221 = smul.u32 13, %s16
      %s222 = smul.u32 13, %s16
      %p223 = scmp.lt.s32.totalorder %s222, 25
      %s224 = scalar_select %p223, %s222, 25
      %s225 = smul.addr %s224, 8
      %s226 = scalar_lea.vmem %s5, %s225
      %s227 = smul.u32 13, %s16
      %v228 = vld [vmem:[%s220] sm:$0xff]
      %v229 = vld [vmem:[%s220 + $0x8] sm:$0xff]
      %v230 = vld [vmem:[%s220 + $0x10] sm:$0xff]
      %v231 = vld [vmem:[%s220 + $0x18] sm:$0xff]
      %v232 = vld [vmem:[%s220 + $0x20] sm:$0xff]
      %v233 = vld [vmem:[%s220 + $0x28] sm:$0xff]
      %v234 = vld [vmem:[%s220 + $0x30] sm:$0xff]
      %v235 = vld [vmem:[%s220 + $0x38] sm:$0xff]
      %v236 = vld [vmem:[%s220 + $0x40] sm:$0xff]
      %v237 = vld [vmem:[%s220 + $0x48] sm:$0xff]
      %v238 = vld [vmem:[%s220 + $0x50] sm:$0xff]
      %v239 = vld [vmem:[%s220 + $0x58] sm:$0xff]
      %v240 = vld [vmem:[%s220 + $0x60] sm:$0xff]
      %v241 = vld [vmem:[%s1] sm:$0xff]
      %v242 = vld [vmem:[%s2] sm:$0x1]
      %v244 = vperm.slane %v242, 0
      %vm246 = vcmask 64512
      %v248 = vsel %vm246, %v228, 0
      %v251 = vsel %vm246, %v229, 0
      %v254 = vsel %vm246, %v230, 0
      %v257 = vsel %vm246, %v231, 0
      %v260 = vsel %vm246, %v232, 0
      %v263 = vsel %vm246, %v233, 0
      %v266 = vsel %vm246, %v234, 0
      %v269 = vsel %vm246, %v235, 0
      %v272 = vsel %vm246, %v236, 0
      %v275 = vsel %vm246, %v237, 0
      %v278 = vsel %vm246, %v238, 0
      %v281 = vsel %vm246, %v239, 0
      %v284 = vsel %vm246, %v240, 0
      %286 = vmatpush.msra.mxu0 0.0
      %287 = vmatpush.msra.mxu0 0.0
      %288 = vmatpush.msra.mxu0 0.0
      %289 = vmatpush.msra.mxu0 0.0
      %290 = vmatpush.msra.mxu0 0.0
      %291 = vmatpush.msra.mxu0 0.0
      %292 = vmatpush.msra.mxu0 0.0
      %293 = vmatpush.msra.mxu0 0.0
      %294 = vmatpush.msra.mxu0 0.0
      %295 = vmatpush.msra.mxu0 0.0
      %296 = vmatpush.msra.mxu0 0.0
      %297 = vmatpush.msra.mxu0 0.0
      %298 = vmatpush.msra.mxu0 0.0
      %299 = vmatpush.msra.mxu0 0.0
      %300 = vmatpush.msra.mxu0 0.0
      %301 = vmatpush.msra.mxu0 %v241
      %302 = vmatmul.f32.gmra.mxu0 %v248
      %v303 = vpop.f32.mrf.mxu0
      %v304 = vadd.f32 %v244, %v303
      %305 = vmatmul.f32.gmra.mxu0 %v251
      %v306 = vpop.f32.mrf.mxu0
      %v307 = vadd.f32 %v244, %v306
      %308 = vmatmul.f32.gmra.mxu0 %v254
      %v309 = vpop.f32.mrf.mxu0
      %v310 = vadd.f32 %v244, %v309
      %311 = vmatmul.f32.gmra.mxu0 %v257
      %v312 = vpop.f32.mrf.mxu0
      %v313 = vadd.f32 %v244, %v312
      %314 = vmatmul.f32.gmra.mxu0 %v260
      %v315 = vpop.f32.mrf.mxu0
      %v316 = vadd.f32 %v244, %v315
      %317 = vmatmul.f32.gmra.mxu0 %v263
      %v318 = vpop.f32.mrf.mxu0
      %v319 = vadd.f32 %v244, %v318
      %320 = vmatmul.f32.gmra.mxu0 %v266
      %v321 = vpop.f32.mrf.mxu0
      %v322 = vadd.f32 %v244, %v321
      %323 = vmatmul.f32.gmra.mxu0 %v269
      %v324 = vpop.f32.mrf.mxu0
      %v325 = vadd.f32 %v244, %v324
      %326 = vmatmul.f32.gmra.mxu0 %v272
      %v327 = vpop.f32.mrf.mxu0
      %v328 = vadd.f32 %v244, %v327
      %329 = vmatmul.f32.gmra.mxu0 %v275
      %v330 = vpop.f32.mrf.mxu0
      %v331 = vadd.f32 %v244, %v330
      %332 = vmatmul.f32.gmra.mxu0 %v278
      %v333 = vpop.f32.mrf.mxu0
      %v334 = vadd.f32 %v244, %v333
      %335 = vmatmul.f32.gmra.mxu0 %v281
      %v336 = vpop.f32.mrf.mxu0
      %v337 = vadd.f32 %v244, %v336
      %338 = vmatmul.f32.gmra.mxu0 %v284
      %v339 = vpop.f32.mrf.mxu0
      %v340 = vadd.f32 %v244, %v339
      %341 = vdwg.mxu0
      %v342 = vtanh.pop %v304
      %v343 = vtanh.pop %v307
      %v344 = vtanh.pop %v310
      %v345 = vtanh.pop %v313
      %v346 = vtanh.pop %v316
      %v347 = vtanh.pop %v319
      %v348 = vtanh.pop %v322
      %v349 = vtanh.pop %v325
      %v350 = vtanh.pop %v328
      %v351 = vtanh.pop %v331
      %v352 = vtanh.pop %v334
      %v353 = vtanh.pop %v337
      %v354 = vtanh.pop %v340
      %v355 = vld [vmem:[%s3] sm:$0xff]
      %v356 = vld [vmem:[%s3 + $0x8] sm:$0xff]
      %v357 = vld [vmem:[%s3 + $0x10] sm:$0xff]
      %v358 = vld [vmem:[%s3 + $0x18] sm:$0xff]
      %v359 = vld [vmem:[%s4] sm:$0x1]
      %v361 = vperm.slane %v359, 0
      %vm363 = vcmask 261120
      %v365 = vsel %vm363, %v342, 0
      %v368 = vsel %vm363, %v343, 0
      %v371 = vsel %vm363, %v344, 0
      %v374 = vsel %vm363, %v345, 0
      %v377 = vsel %vm363, %v346, 0
      %v380 = vsel %vm363, %v347, 0
      %v383 = vsel %vm363, %v348, 0
      %v386 = vsel %vm363, %v349, 0
      %v389 = vsel %vm363, %v350, 0
      %v392 = vsel %vm363, %v351, 0
      %v395 = vsel %vm363, %v352, 0
      %v398 = vsel %vm363, %v353, 0
      %v401 = vsel %vm363, %v354, 0
      %403 = vmatpush.msra.mxu0 0.0
      %404 = vmatpush.msra.mxu0 0.0
      %405 = vmatpush.msra.mxu0 0.0
      %406 = vmatpush.msra.mxu0 0.0
      %407 = vmatpush.msra.mxu0 0.0
      %408 = vmatpush.msra.mxu0 0.0
      %409 = vmatpush.msra.mxu0 0.0
      %410 = vmatpush.msra.mxu0 0.0
      %411 = vmatpush.msra.mxu0 0.0
      %412 = vmatpush.msra.mxu0 0.0
      %413 = vmatpush.msra.mxu0 0.0
      %414 = vmatpush.msra.mxu0 0.0
      %415 = vmatpush.msra.mxu0 %v358
      %416 = vmatpush.msra.mxu0 %v357
      %417 = vmatpush.msra.mxu0 %v356
      %418 = vmatpush.msra.mxu0 %v355
      %419 = vmatmul.f32.gmra.mxu0 %v365
      %v420 = vpop.f32.mrf.mxu0
      %v421 = vadd.f32 %v361, %v420
      %422 = vmatmul.f32.gmra.mxu0 %v368
      %v423 = vpop.f32.mrf.mxu0
      %v424 = vadd.f32 %v361, %v423
      %425 = vmatmul.f32.gmra.mxu0 %v371
      %v426 = vpop.f32.mrf.mxu0
      %v427 = vadd.f32 %v361, %v426
      %428 = vmatmul.f32.gmra.mxu0 %v374
      %v429 = vpop.f32.mrf.mxu0
      %v430 = vadd.f32 %v361, %v429
      %431 = vmatmul.f32.gmra.mxu0 %v377
      %v432 = vpop.f32.mrf.mxu0
      %v433 = vadd.f32 %v361, %v432
      %434 = vmatmul.f32.gmra.mxu0 %v380
      %v435 = vpop.f32.mrf.mxu0
      %v436 = vadd.f32 %v361, %v435
      %437 = vmatmul.f32.gmra.mxu0 %v383
      %v438 = vpop.f32.mrf.mxu0
      %v439 = vadd.f32 %v361, %v438
      %440 = vmatmul.f32.gmra.mxu0 %v386
      %v441 = vpop.f32.mrf.mxu0
      %v442 = vadd.f32 %v361, %v441
      %443 = vmatmul.f32.gmra.mxu0 %v389
      %v444 = vpop.f32.mrf.mxu0
      %v445 = vadd.f32 %v361, %v444
      %446 = vmatmul.f32.gmra.mxu0 %v392
      %v447 = vpop.f32.mrf.mxu0
      %v448 = vadd.f32 %v361, %v447
      %449 = vmatmul.f32.gmra.mxu0 %v395
      %v450 = vpop.f32.mrf.mxu0
      %v451 = vadd.f32 %v361, %v450
      %452 = vmatmul.f32.gmra.mxu0 %v398
      %v453 = vpop.f32.mrf.mxu0
      %v454 = vadd.f32 %v361, %v453
      %455 = vmatmul.f32.gmra.mxu0 %v401
      %v456 = vpop.f32.mrf.mxu0
      %v457 = vadd.f32 %v361, %v456
      %458 = vdwg.mxu0
      %vm459 = vcmask 31744
      %460 = vst.msk [vmem:[%s226] sm:$0xff] %vm459, %v421
      %461 = vst.msk [vmem:[%s226 + $0x8] sm:$0xff] %vm459, %v424
      %462 = vst.msk [vmem:[%s226 + $0x10] sm:$0xff] %vm459, %v427
      %463 = vst.msk [vmem:[%s226 + $0x18] sm:$0xff] %vm459, %v430
      %464 = vst.msk [vmem:[%s226 + $0x20] sm:$0xff] %vm459, %v433
      %465 = vst.msk [vmem:[%s226 + $0x28] sm:$0xff] %vm459, %v436
      %466 = vst.msk [vmem:[%s226 + $0x30] sm:$0xff] %vm459, %v439
      %467 = vst.msk [vmem:[%s226 + $0x38] sm:$0xff] %vm459, %v442
      %468 = vst.msk [vmem:[%s226 + $0x40] sm:$0xff] %vm459, %v445
      %469 = vst.msk [vmem:[%s226 + $0x48] sm:$0xff] %vm459, %v448
      %470 = vst.msk [vmem:[%s226 + $0x50] sm:$0xff] %vm459, %v451
      %471 = vst.msk [vmem:[%s226 + $0x58] sm:$0xff] %vm459, %v454
      %472 = vst.msk [vmem:[%s226 + $0x60] sm:$0xff] %vm459, %v457
      %s473 = smul.u32 13, %s16
      %p474 = scmp.lt.s32.totalorder %s473, 25
      %s475 = scalar_select %p474, %s473, 25
      %s476 = smul.addr %s475, 8
      %s477 = scalar_lea.vmem %s5, %s476
      // Predicated region
      $region41: #{tpu_custom_call.1} parent=39 // pred_check
        %p478 = pneg %p144
      $region42: #{tpu_custom_call.1} parent=39 // pred_check_branch
        %480 = sbr.rel (%p478) target = $region44
      $region43: #{tpu_custom_call.1} parent=39 // pred_region
        %s481 = smul.u32 13, %s16
      $region44: #{tpu_custom_call.1} parent=39 // pred_fallthru
        _
    $region40: #{tpu_custom_call.1} parent=5 // pred_fallthru
      _
    %p482 = scmp.le.s32.totalorder 2, %s11
    // Predicated region
    $region45: #{tpu_custom_call.1} parent=5 // pred_check
      %p483 = pneg %p482
    $region46: #{tpu_custom_call.1} parent=5 // pred_check_branch
      %485 = sbr.rel (%p483) target = $region48
    $region47: #{tpu_custom_call.1} parent=5 // pred_region
      %s486 = ssub.s32 %s11, 2
      // Predicated region
      $region49: #{tpu_custom_call.1} parent=47 // pred_check
        %p487 = pneg %p150
      $region50: #{tpu_custom_call.1} parent=47 // pred_check_branch
        %489 = sbr.rel (%p487) target = $region52
      $region51: #{tpu_custom_call.1} parent=47 // pred_region
        %s490 = smul.u32 13, %s17
        %p491 = scmp.lt.s32.totalorder %s490, 25
        %s492 = scalar_select %p491, %s490, 25
        %s493 = smul.addr %s492, 8
        %s494 = scalar_lea.vmem %s5, %s493
      $region52: #{tpu_custom_call.1} parent=47 // pred_fallthru
        _
    $region48: #{tpu_custom_call.1} parent=5 // pred_fallthru
      _
  $region6: #{tpu_custom_call.1} parent=0 // loop_footer
    %s15 = sadd.s32 1, %s11
  $region7: #{tpu_custom_call.1} parent=0 // loop_footer_branch
    %10 = sbr.rel target = $region3
  $region8: #{tpu_custom_call.1} parent=0 // loop_exit
    _

</llo_original>
